<compile_context>
chip_gen: v5e
topology: v5e:2x2
jax: 0.10.0
libtpu: 0.0.40
codegen_flags: <defaults>
</compile_context>

<pallas_src>
import functools

import jax
import jax.numpy as jnp
from jax.experimental import pallas as pl
from jax.experimental.pallas import tpu as pltpu


def enhance_weight_kernel(params_ref, x_ref, o_ref, *, compute_dtype):
    # params_ref: SMEM f32[2] = [w, b]  (scalar weight / bias of Linear(1,1))
    # x_ref / o_ref: VMEM (t_rows, 128) lane-dense tiles.
    w = params_ref[0].astype(compute_dtype)
    b = params_ref[1].astype(compute_dtype)
    x = x_ref[...].astype(compute_dtype)
    y = jnp.tanh(x * w + b) + 1.0          # weak-typed 1.0 keeps compute_dtype
    o_ref[...] = y.astype(o_ref.dtype)


def _round_up(a, m):
    return ((a + m - 1) // m) * m


def _tpu_generation():
    try:
        kind = jax.devices()[0].device_kind.lower()
    except Exception:
        return "unknown"
    for g in ("v7", "v6", "v5"):
        if g in kind:
            return g
    return "unknown"


def _kernel_config():
    gen = _tpu_generation()
    if gen in ("v5", "v6"):
        # 128 MiB VMEM parts: 8 MiB f32 blocks, 4 buffers (in+out, 2x) = 32 MiB.
        return dict(tile_rows=16384, vmem_limit=64 * 1024 * 1024,
                    min_steps=2, bf16_compute_ok=(gen != "v5"))
    if gen == "v7":
        # 64 MiB VMEM: 4 MiB f32 blocks -> 16 MiB total buffering; >=4 grid
        # steps so both TensorCores get work and prologue DMA overlaps.
        return dict(tile_rows=8192, vmem_limit=32 * 1024 * 1024,
                    min_steps=4, bf16_compute_ok=True)
    # Unknown generation: conservative settings, safe everywhere.
    return dict(tile_rows=8192, vmem_limit=32 * 1024 * 1024,
                min_steps=2, bf16_compute_ok=False)


def enhance_weight(x, weight, bias, *, lane=128):
    """x: any shape (module uses (B, C, H, W, 1)). weight/bias: Linear(1,1) params."""
    orig_shape = x.shape
    orig_dtype = x.dtype
    cfg = _kernel_config()

    # PyTorch Linear(1,1) weight is (1,1), bias is (1,) -> flatten to scalars.
    w = jnp.reshape(jnp.asarray(weight, jnp.float32), ())
    b = jnp.reshape(jnp.asarray(bias, jnp.float32), ())

    n = x.size
    if n == 0 or n % lane != 0:
        # Ragged / tiny element count: one fused XLA elementwise pass (2n HBM
        # traffic == the kernel's roofline). Avoids the previous bulk-kernel +
        # concatenate path, which re-materialized the whole output.
        y = jnp.tanh(x.astype(jnp.float32) * w + b) + 1.0
        return y.astype(orig_dtype)

    # f32 / bf16 stream through the kernel in-place (single HBM pass); other
    # dtypes (rare for this module) are converted in the wrapper.
    if orig_dtype in (jnp.dtype(jnp.bfloat16), jnp.dtype(jnp.float32)):
        io_dtype = orig_dtype
        x_io = x
    else:
        io_dtype = jnp.dtype(jnp.float32)
        x_io = x.astype(io_dtype)

    compute_dtype = (jnp.bfloat16
                     if (io_dtype == jnp.dtype(jnp.bfloat16) and cfg["bf16_compute_ok"])
                     else jnp.float32)

    params = jnp.stack([w, b])                 # f32[2] -> SMEM via scalar prefetch

    rows = n // lane
    x2d = x_io.reshape(rows, lane)             # free, contiguous

    # Tile rows: as big as the generation budget allows, but ensure at least
    # `min_steps` grid steps so pipelining / megacore sharding engage; 16-row
    # granularity covers both f32 (8) and bf16 (16) sublane packing. Partial
    # last blocks (rows % t_rows != 0, or rows < 16) are masked by Pallas.
    t_rows = min(cfg["tile_rows"],
                 _round_up(pl.cdiv(rows, cfg["min_steps"]), 16))
    grid = (pl.cdiv(rows, t_rows),)

    kernel = functools.partial(enhance_weight_kernel, compute_dtype=compute_dtype)

    out2d = pl.pallas_call(
        kernel,
        out_shape=jax.ShapeDtypeStruct((rows, lane), io_dtype),
        grid_spec=pltpu.PrefetchScalarGridSpec(
            num_scalar_prefetch=1,             # params -> SMEM, prefetched
            grid=grid,
            in_specs=[
                pl.BlockSpec((t_rows, lane), lambda i, p: (i, 0)),
            ],
            out_specs=pl.BlockSpec((t_rows, lane), lambda i, p: (i, 0)),
        ),
        compiler_params=pltpu.CompilerParams(
            dimension_semantics=("parallel",),  # shard row loop across TCs (v7x)
            vmem_limit_bytes=cfg["vmem_limit"],
        ),
    )(params, x2d)

    out = out2d.reshape(orig_shape)
    if out.dtype != orig_dtype:
        out = out.astype(orig_dtype)
    return out


if __name__ == "__main__":
    key = jax.random.PRNGKey(0)
    k_x, k_w, k_b = jax.random.split(key, 3)

    # Deterministic "Linear(1,1)" params in PyTorch's native shapes:
    # weight (1,1), bias (1,) (kaiming_uniform with fan_in=1 -> U(-1,1)).
    weight = jax.random.uniform(k_w, (1, 1), jnp.float32, minval=-1.0, maxval=1.0)
    bias = jax.random.uniform(k_b, (1,), jnp.float32, minval=-1.0, maxval=1.0)
    w_s = weight.reshape(())
    b_s = bias.reshape(())

    fn = jax.jit(enhance_weight)

    def ref_fn(xx):
        return jnp.tanh(xx.astype(jnp.float32) * w_s + b_s) + 1.0

    # 1) Main check: NCHW feature map with trailing size-1 feature dim (f32).
    B, C, H, W = 2, 4, 16, 16
    x = jax.random.normal(k_x, (B, C, H, W, 1), jnp.float32)
    out = jax.block_until_ready(fn(x, weight, bias))
    assert out.shape == x.shape and out.dtype == x.dtype
    assert jnp.allclose(out, ref_fn(x), atol=1e-5, rtol=1e-5)

    # 2) bf16 I/O (bf16 compute on v6e/v7x, f32 compute on v5e/unknown).
    x_bf16 = x.astype(jnp.bfloat16)
    out_bf16 = jax.block_until_ready(fn(x_bf16, weight, bias))
    assert out_bf16.dtype == jnp.bfloat16 and out_bf16.shape == x_bf16.shape
    assert jnp.allclose(out_bf16.astype(jnp.float32), ref_fn(x_bf16),
                        atol=3e-2, rtol=3e-2)

    # 3) bf16, rows (=40) not a multiple of 16 -> partial last row-block.
    x_r40 = jax.random.normal(k_x, (1, 5, 8, 128, 1), jnp.bfloat16)
    out_r40 = jax.block_until_ready(fn(x_r40, weight, bias))
    assert out_r40.shape == x_r40.shape and out_r40.dtype == jnp.bfloat16
    assert jnp.allclose(out_r40.astype(jnp.float32), ref_fn(x_r40),
                        atol=3e-2, rtol=3e-2)

    # 4) bf16, rows (=3) < 16 -> block larger than array, fully masked block.
    x_r3 = jax.random.normal(k_x, (1, 1, 3, 128, 1), jnp.bfloat16)
    out_r3 = jax.block_until_ready(fn(x_r3, weight, bias))
    assert out_r3.shape == x_r3.shape and out_r3.dtype == jnp.bfloat16
    assert jnp.allclose(out_r3.astype(jnp.float32), ref_fn(x_r3),
                        atol=3e-2, rtol=3e-2)

    # 5) Non-128-divisible element count -> single fused XLA pass (no concat).
    x_odd = jax.random.normal(k_x, (2, 3, 7, 5, 1), jnp.float32)
    out_odd = jax.block_until_ready(fn(x_odd, weight, bias))
    assert out_odd.shape == x_odd.shape
    assert jnp.allclose(out_odd, ref_fn(x_odd), atol=1e-5, rtol=1e-5)

    print("KERNEL_OK")
</pallas_src>

<mosaic_0001>
module attributes {stable_mosaic.version = 11 : i64} {
  func.func @enhance_weight_kernel(%arg0: i32, %arg1: memref<2xf32, #tpu.memory_space<smem>>, %arg2: memref<16x128xf32, #tpu.memory_space<vmem>>, %arg3: memref<16x128xf32, #tpu.memory_space<vmem>>) attributes {dimension_semantics = [#tpu.dimension_semantics<parallel>], iteration_bounds = array<i64: 1>, scalar_prefetch = 1 : i64, scratch_operands = 0 : i64, tpu.core_type = #tpu.core_type<tc>, window_params = [{transform_indices = @transform_0, window_bounds = array<i64: 16, 128>}, {transform_indices = @transform_1, window_bounds = array<i64: 16, 128>}]} {
    %c0 = arith.constant 0 : index
    %0 = memref.load %arg1[%c0] : memref<2xf32, #tpu.memory_space<smem>>
    %c1 = arith.constant 1 : index
    %1 = memref.load %arg1[%c1] : memref<2xf32, #tpu.memory_space<smem>>
    %c0_0 = arith.constant 0 : index
    %c0_1 = arith.constant 0 : index
    %2 = vector.load %arg2[%c0_0, %c0_1] : memref<16x128xf32, #tpu.memory_space<vmem>>, vector<16x128xf32>
    %3 = vector.broadcast %0 : f32 to vector<16x128xf32>
    %4 = arith.mulf %2, %3 : vector<16x128xf32>
    %5 = vector.broadcast %1 : f32 to vector<16x128xf32>
    %6 = arith.addf %4, %5 : vector<16x128xf32>
    %7 = math.tanh %6 : vector<16x128xf32>
    %cst = arith.constant 1.000000e+00 : f32
    %8 = vector.broadcast %cst : f32 to vector<16x128xf32>
    %9 = arith.addf %7, %8 : vector<16x128xf32>
    %c0_2 = arith.constant 0 : index
    %c0_3 = arith.constant 0 : index
    %10 = vector.load %arg3[%c0_2, %c0_3] : memref<16x128xf32, #tpu.memory_space<vmem>>, vector<16x128xf32>
    tpu.vector_store %arg3[%c0_2, %c0_3], %9 {strides = array<i32>} : memref<16x128xf32, #tpu.memory_space<vmem>>, vector<16x128xf32>,
    return
  }
  func.func @transform_0(%arg0: i32, %arg1: memref<2xf32, #tpu.memory_space<smem>>) -> (i32, i32) {
    %c0_i32 = arith.constant 0 : i32
    %c0_i32_0 = arith.constant 0 : i32
    return %arg0, %c0_i32 : i32, i32
  }
  func.func @transform_1(%arg0: i32, %arg1: memref<2xf32, #tpu.memory_space<smem>>) -> (i32, i32) {
    %c0_i32 = arith.constant 0 : i32
    %c0_i32_0 = arith.constant 0 : i32
    return %arg0, %c0_i32 : i32, i32
  }
}

</mosaic_0001>

<llo_original>
// kernel: enhance_weight.1
$region0: #{enhance_weight.1}
  #allocation0 [shape = 'u32[]', space=smem, size = 0x4, offset = 0x4, fixed_abs, tag = 'smem constant byte address 0x4 - core index']
  #allocation1 [shape = 'u32[72,128]{1,0:T(1,128)}', space=vmem, size = 0x9000, scoped, tag = 'internal scratch']
  #allocation2 [shape = 's32[1]{0}', space=sflag, size = 0x4, scoped, tag = 'scoped memory for enhance_weight.1']
  #allocation3 [shape = 'u8[512]{0}', space=smem, size = 0x200, scoped, tag = 'prefetched SMEM operand 0']
  %s0 = inlined_call_operand.vmem [shape: f32[2], index: 0, kind: input, shape index: {}]
  %s1 = inlined_call_operand.vmem [shape: f32[16,128], index: 1, kind: input, shape index: {}]
  %s2 = inlined_call_operand.vmem [shape: f32[16,128], index: 2, kind: output, shape index: {}]
  %s3 = sld [smem:[#allocation0]]
  $region14: #{enhance_weight.1} parent=0
    _
  %s5 = ssub.s32 1, %s3
  %s6 = scalar_select 0, %s5, %s3
  %s8 = sshll.u32 %s0, 4
  %s9 = int_to_ptr.vmem [resolvable:$true] %s8
  %11 = dma.vmem_to_smem %s9, 16, [#allocation3], [#allocation2]
  %13 = dma.done [#allocation2], 16
  %14 = sfence
  // Predicated region
  $region2: #{enhance_weight.1} parent=0 // pred_check
    _
  $region3: #{enhance_weight.1} parent=0 // pred_check_branch
    %16 = sbr.rel (0) target = $region5
  $region4: #{enhance_weight.1} parent=0 // pred_region
    _
  $region5: #{enhance_weight.1} parent=0 // pred_fallthru
    _
  %s17 = sld [smem:[#allocation3]]
  %s18 = sld [smem:[#allocation3 + $0x1]]
  %v19 = vld [vmem:[%s1] sm:$0xff]
  %v20 = vld [vmem:[%s1 + $0x8] sm:$0xff]
  %v21 = vstv %s17
  %v22 = vmul.f32 %v19, %v21
  %v23 = vmul.f32 %v20, %v21
  %v24 = vstv %s18
  %v25 = vadd.f32 %v22, %v24
  %v26 = vadd.f32 %v23, %v24
  %v27 = vtanh.pop %v25
  %v28 = vtanh.pop %v26
  %v29 = vadd.f32 %v27, 1.0
  %v30 = vadd.f32 %v28, 1.0
  %31 = vst [vmem:[%s2] sm:$0xff] %v29
  %32 = vst [vmem:[%s2 + $0x8] sm:$0xff] %v30
  // Predicated region
  $region6: #{enhance_weight.1} parent=0 // pred_check
    _
  $region7: #{enhance_weight.1} parent=0 // pred_check_branch
    %34 = sbr.rel (0) target = $region9
  $region8: #{enhance_weight.1} parent=0 // pred_region
    _
  $region9: #{enhance_weight.1} parent=0 // pred_fallthru
    _
  // Predicated region
  $region10: #{enhance_weight.1} parent=0 // pred_check
    _
  $region11: #{enhance_weight.1} parent=0 // pred_check_branch
    %36 = sbr.rel (0) target = $region13
  $region12: #{enhance_weight.1} parent=0 // pred_region
    _
  $region13: #{enhance_weight.1} parent=0 // pred_fallthru
    _

</llo_original>
